<compile_context>
chip_gen: v5e
topology: v5e:2x2
jax: 0.10.0
libtpu: 0.0.40
codegen_flags: <defaults>
</compile_context>

<pallas_src>
import functools

import jax
import jax.numpy as jnp
from jax.experimental import pallas as pl
from jax.experimental.pallas import tpu as pltpu

LANE = 128
SUB = 8
UNIT = SUB * LANE          # kernel handles a multiple of 1024 elements
DEFAULT_TARGET_ROWS = 1024  # ~512 KiB per f32 input block


def _target_rows():
    """Larger row tiles on v7x to amortize per-grid-step overhead."""
    try:
        kind = jax.devices()[0].device_kind.lower()
        if "v7" in kind:
            return 2048
    except Exception:
        pass
    return DEFAULT_TARGET_ROWS


def _int_pow(w, gi):
    """w**gi for integer gi >= 1 via binary exponentiation (no ones() seed)."""
    result = None
    base = w
    e = gi
    while e:
        if e & 1:
            result = base if result is None else result * base
        e >>= 1
        if e:
            base = base * base
    return result


def _pow_gamma(w, gamma):
    g = float(gamma)
    if g == 0.0:
        return jnp.ones_like(w)
    if g == int(g) and 1 <= int(g) <= 16:
        return _int_pow(w, int(g))
    return w ** g


def _focal_sum_kernel(x_ref, t_ref, out_ref, *, gamma, rows, tr,
                      has_partial, assume_binary_targets):
    i = pl.program_id(0)

    @pl.when(i == 0)
    def _init():
        out_ref[...] = jnp.zeros_like(out_ref)

    x = x_ref[...].astype(jnp.float32)
    t = t_ref[...].astype(jnp.float32)

    # Stable softplus: softplus(x) = max(x, 0) + log1p(exp(-|x|)).
    e = jnp.exp(-jnp.abs(x))
    sp = jnp.maximum(x, 0.0) + jnp.log1p(e)
    # PyTorch F.binary_cross_entropy clamps log terms at -100.
    logp = jnp.maximum(x - sp, -100.0)      # log(sigmoid(x))
    log1mp = jnp.maximum(-sp, -100.0)       # log(1 - sigmoid(x))
    logpt = t * logp + (1.0 - t) * log1mp   # = -BCE(sigmoid(x), t)

    if assume_binary_targets:
        # Hard {0,1} targets: pt is just sigmoid(x) or 1-sigmoid(x); reuse e,
        # saving one heavy EUP exp per element (approx reciprocal is near-free).
        r = pl.reciprocal(1.0 + e, approx=True)
        p = jnp.where(x >= 0.0, r, e * r)   # sigmoid(x), stable both signs
        pt = t * p + (1.0 - t) * (1.0 - p)
    else:
        pt = jnp.exp(logpt)

    w = 1.0 - pt                            # logpt <= 0 -> pt <= 1 -> w >= 0
    wp = _pow_gamma(w, gamma)
    contrib = wp * logpt                    # negated once in the wrapper

    def _accum(vals):
        # Fold rows into the resident (8,128) accumulator with pure VPU adds.
        out_ref[...] += vals.reshape(tr // SUB, SUB, LANE).sum(axis=0)

    if has_partial:
        last = pl.num_programs(0) - 1

        @pl.when(i == last)
        def _tail_tile():
            # Mask rows (not flat indices) -> no int32 overflow for huge n.
            row_ids = jax.lax.broadcasted_iota(jnp.int32, (tr, LANE), 0)
            mask = (i * tr + row_ids) < rows
            _accum(jnp.where(mask, contrib, 0.0))

        @pl.when(i != last)
        def _full_tile():
            _accum(contrib)
    else:
        _accum(contrib)


def _prep_logits(a):
    if a.dtype in (jnp.float32, jnp.bfloat16):
        return a
    return a.astype(jnp.float32)


def _prep_targets(a):
    if a.dtype in (jnp.float32, jnp.bfloat16):
        return a
    if a.dtype == jnp.bool_ or jnp.issubdtype(a.dtype, jnp.integer):
        # Binary-coded targets: bf16 is exact for {0,1} and halves HBM traffic
        # vs f32.  (1-byte native streams would need 32-row sublane tiling.)
        return a.astype(jnp.bfloat16)
    return a.astype(jnp.float32)


def _tail_focal_sum(xt, tt, gamma):
    sp = jnp.maximum(xt, 0.0) + jnp.log1p(jnp.exp(-jnp.abs(xt)))
    logp = jnp.maximum(xt - sp, -100.0)
    log1mp = jnp.maximum(-sp, -100.0)
    logpt = tt * logp + (1.0 - tt) * log1mp
    pt = jnp.exp(logpt)
    wp = _pow_gamma(1.0 - pt, gamma)
    return jnp.sum(wp * logpt)


@functools.partial(jax.jit, static_argnames=("gamma", "assume_binary_targets"))
def _focal_loss_impl(logits, targets, gamma, assume_binary_targets):
    n = logits.size
    x_flat = _prep_logits(logits).reshape(-1)
    t_flat = _prep_targets(targets).reshape(-1)

    n_main = (n // UNIT) * UNIT
    total = jnp.float32(0.0)

    if n_main:
        rows = n_main // LANE          # multiple of 8 by construction
        xm = x_flat[:n_main].reshape(rows, LANE)
        tm = t_flat[:n_main].reshape(rows, LANE)

        target_rows = _target_rows()
        if rows <= target_rows:
            tr = rows                  # single full-extent block, no masking
            num_tiles = 1
            has_partial = False
        else:
            tr = target_rows
            num_tiles = pl.cdiv(rows, tr)
            has_partial = (rows % tr) != 0

        kernel = functools.partial(
            _focal_sum_kernel,
            gamma=float(gamma),
            rows=rows,
            tr=tr,
            has_partial=has_partial,
            assume_binary_targets=bool(assume_binary_targets),
        )

        cost = pl.CostEstimate(
            flops=25 * n_main,
            transcendentals=3 * n_main,
            bytes_accessed=(xm.size * xm.dtype.itemsize
                            + tm.size * tm.dtype.itemsize
                            + SUB * LANE * 4),
        )

        partial = pl.pallas_call(
            kernel,
            out_shape=jax.ShapeDtypeStruct((SUB, LANE), jnp.float32),
            grid_spec=pltpu.PrefetchScalarGridSpec(
                num_scalar_prefetch=0,
                grid=(num_tiles,),
                in_specs=[
                    pl.BlockSpec((tr, LANE), lambda i: (i, 0)),
                    pl.BlockSpec((tr, LANE), lambda i: (i, 0)),
                ],
                out_specs=pl.BlockSpec((SUB, LANE), lambda i: (0, 0)),
            ),
            compiler_params=pltpu.CompilerParams(
                dimension_semantics=("arbitrary",),
            ),
            cost_estimate=cost,
        )(xm, tm)
        total = total + jnp.sum(partial)

    n_tail = n - n_main
    if n_tail:
        xt = x_flat[n_main:].astype(jnp.float32)
        tt = t_flat[n_main:].astype(jnp.float32)
        total = total + _tail_focal_sum(xt, tt, float(gamma))

    # Accumulated +wp*logpt; single negate + mean here.
    return -total / jnp.float32(n)


def focal_loss_pallas(logits, targets, gamma=2.0, assume_binary_targets=False):
    """Equivalent of FocalLoss(gamma).forward(logits, targets) -> scalar mean."""
    assert logits.shape == targets.shape
    assert logits.size > 0
    return _focal_loss_impl(logits, targets, float(gamma),
                            bool(assume_binary_targets))


def _focal_loss_ref(logits, targets, gamma=2.0):
    # Literal translation of the PyTorch module (naive math path).
    p = jax.nn.sigmoid(logits.astype(jnp.float32))
    t = targets.astype(jnp.float32)
    logp = jnp.maximum(jnp.log(p), -100.0)
    log1mp = jnp.maximum(jnp.log(1.0 - p), -100.0)
    logpt = t * logp + (1.0 - t) * log1mp
    pt = jnp.exp(logpt)
    return jnp.mean(-((1.0 - pt) ** gamma) * logpt)


if __name__ == "__main__":
    key = jax.random.PRNGKey(0)
    k1, k2 = jax.random.split(key)

    # NCHW-style logits and binary targets (targets must be in [0, 1] for BCE).
    x = jax.random.normal(k1, (2, 4, 16, 16), dtype=jnp.float32)
    y = jax.random.bernoulli(k2, 0.5, (2, 4, 16, 16)).astype(jnp.float32)

    loss = focal_loss_pallas(x, y, gamma=2.0)
    loss = jax.block_until_ready(loss)

    ref = _focal_loss_ref(x, y, gamma=2.0)
    assert jnp.allclose(loss, ref, rtol=1e-4, atol=1e-6), (loss, ref)

    print("KERNEL_OK")
</pallas_src>

<mosaic_0001>
module attributes {stable_mosaic.version = 11 : i64} {
  func.func @_focal_sum_kernel(%arg0: i32, %arg1: memref<16x128xf32, #tpu.memory_space<vmem>>, %arg2: memref<16x128xf32, #tpu.memory_space<vmem>>, %arg3: memref<8x128xf32, #tpu.memory_space<vmem>>) attributes {dimension_semantics = [#tpu.dimension_semantics<arbitrary>], iteration_bounds = array<i64: 1>, scalar_prefetch = 0 : i64, scratch_operands = 0 : i64, tpu.core_type = #tpu.core_type<tc>, window_params = [{transform_indices = @transform_0, window_bounds = array<i64: 16, 128>}, {transform_indices = @transform_1, window_bounds = array<i64: 16, 128>}, {pipeline_mode = #tpu.pipeline_mode<synchronous>, transform_indices = @transform_2, window_bounds = array<i64: 8, 128>}]} {
    %c0_i32 = arith.constant 0 : i32
    %0 = arith.cmpi eq, %arg0, %c0_i32 : i32
    %1 = arith.extui %0 : i1 to i32
    %c0_i32_0 = arith.constant 0 : i32
    %2 = arith.cmpi ne, %1, %c0_i32_0 : i32
    scf.if %2 {
      %cst_15 = arith.constant 0.000000e+00 : f32
      %35 = vector.broadcast %cst_15 : f32 to vector<8x128xf32>
      %c0_16 = arith.constant 0 : index
      %c0_17 = arith.constant 0 : index
      %36 = vector.load %arg3[%c0_16, %c0_17] : memref<8x128xf32, #tpu.memory_space<vmem>>, vector<8x128xf32>
      tpu.vector_store %arg3[%c0_16, %c0_17], %35 {strides = array<i32>} : memref<8x128xf32, #tpu.memory_space<vmem>>, vector<8x128xf32>,
    } else {
    }
    %c0 = arith.constant 0 : index
    %c0_1 = arith.constant 0 : index
    %3 = vector.load %arg1[%c0, %c0_1] : memref<16x128xf32, #tpu.memory_space<vmem>>, vector<16x128xf32>
    %c0_2 = arith.constant 0 : index
    %c0_3 = arith.constant 0 : index
    %4 = vector.load %arg2[%c0_2, %c0_3] : memref<16x128xf32, #tpu.memory_space<vmem>>, vector<16x128xf32>
    %5 = math.absf %3 : vector<16x128xf32>
    %cst = arith.constant 0.000000e+00 : f32
    %6 = vector.broadcast %cst : f32 to vector<16x128xf32>
    %7 = arith.subf %6, %5 : vector<16x128xf32>
    %8 = math.exp %7 : vector<16x128xf32>
    %cst_4 = arith.constant 0.000000e+00 : f32
    %9 = vector.broadcast %cst_4 : f32 to vector<16x128xf32>
    %10 = arith.maximumf %3, %9 : vector<16x128xf32>
    %11 = math.log1p %8 : vector<16x128xf32>
    %12 = arith.addf %10, %11 : vector<16x128xf32>
    %13 = arith.subf %3, %12 : vector<16x128xf32>
    %cst_5 = arith.constant -1.000000e+02 : f32
    %14 = vector.broadcast %cst_5 : f32 to vector<16x128xf32>
    %15 = arith.maximumf %13, %14 : vector<16x128xf32>
    %cst_6 = arith.constant 0.000000e+00 : f32
    %16 = vector.broadcast %cst_6 : f32 to vector<16x128xf32>
    %17 = arith.subf %16, %12 : vector<16x128xf32>
    %cst_7 = arith.constant -1.000000e+02 : f32
    %18 = vector.broadcast %cst_7 : f32 to vector<16x128xf32>
    %19 = arith.maximumf %17, %18 : vector<16x128xf32>
    %20 = arith.mulf %4, %15 : vector<16x128xf32>
    %cst_8 = arith.constant 1.000000e+00 : f32
    %21 = vector.broadcast %cst_8 : f32 to vector<16x128xf32>
    %22 = arith.subf %21, %4 : vector<16x128xf32>
    %23 = arith.mulf %22, %19 : vector<16x128xf32>
    %24 = arith.addf %20, %23 : vector<16x128xf32>
    %25 = math.exp %24 : vector<16x128xf32>
    %cst_9 = arith.constant 1.000000e+00 : f32
    %26 = vector.broadcast %cst_9 : f32 to vector<16x128xf32>
    %27 = arith.subf %26, %25 : vector<16x128xf32>
    %28 = arith.mulf %27, %27 : vector<16x128xf32>
    %29 = arith.mulf %28, %24 : vector<16x128xf32>
    %c0_10 = arith.constant 0 : index
    %c0_11 = arith.constant 0 : index
    %30 = vector.load %arg3[%c0_10, %c0_11] : memref<8x128xf32, #tpu.memory_space<vmem>>, vector<8x128xf32>
    %31 = vector.shape_cast %29 : vector<16x128xf32> to vector<2x8x128xf32>
    %cst_12 = arith.constant dense<0.000000e+00> : vector<8x128xf32>
    %32 = vector.multi_reduction <add>, %31, %cst_12 [0] : vector<2x8x128xf32> to vector<8x128xf32>
    %33 = arith.addf %30, %32 : vector<8x128xf32>
    %c0_13 = arith.constant 0 : index
    %c0_14 = arith.constant 0 : index
    %34 = vector.load %arg3[%c0_13, %c0_14] : memref<8x128xf32, #tpu.memory_space<vmem>>, vector<8x128xf32>
    tpu.vector_store %arg3[%c0_13, %c0_14], %33 {strides = array<i32>} : memref<8x128xf32, #tpu.memory_space<vmem>>, vector<8x128xf32>,
    return
  }
  func.func @transform_0(%arg0: i32) -> (i32, i32) {
    %c0_i32 = arith.constant 0 : i32
    %c0_i32_0 = arith.constant 0 : i32
    return %arg0, %c0_i32 : i32, i32
  }
  func.func @transform_1(%arg0: i32) -> (i32, i32) {
    %c0_i32 = arith.constant 0 : i32
    %c0_i32_0 = arith.constant 0 : i32
    return %arg0, %c0_i32 : i32, i32
  }
  func.func @transform_2(%arg0: i32) -> (i32, i32) {
    %c0_i32 = arith.constant 0 : i32
    %c0_i32_0 = arith.constant 0 : i32
    %c0_i32_1 = arith.constant 0 : i32
    return %c0_i32, %c0_i32_0 : i32, i32
  }
}

</mosaic_0001>

<llo_original>
// kernel: _focal_loss_impl.1
$region0: #{_focal_loss_impl.1}
  #allocation0 [shape = 'u32[]', space=smem, size = 0x4, offset = 0x4, fixed_abs, tag = 'smem constant byte address 0x4 - core index']
  #allocation1 [shape = 'u32[72,128]{1,0:T(1,128)}', space=vmem, size = 0x9000, scoped, tag = 'internal scratch']
  %s0 = inlined_call_operand.vmem [shape: f32[16,128], index: 0, kind: input, shape index: {}]
  %s1 = inlined_call_operand.vmem [shape: f32[16,128], index: 1, kind: input, shape index: {}]
  %s2 = inlined_call_operand.vmem [shape: f32[8,128], index: 2, kind: output, shape index: {}]
  %s3 = sld [smem:[#allocation0]]
  $region22: #{_focal_loss_impl.1} parent=0
    _
  %s5 = ssub.s32 1, %s3
  %s6 = scalar_select 0, %s5, %s3
  // Predicated region
  $region2: #{_focal_loss_impl.1} parent=0 // pred_check
    _
  $region3: #{_focal_loss_impl.1} parent=0 // pred_check_branch
    %8 = sbr.rel (0) target = $region5
  $region4: #{_focal_loss_impl.1} parent=0 // pred_region
    _
  $region5: #{_focal_loss_impl.1} parent=0 // pred_fallthru
    _
  // Predicated region
  $region6: #{_focal_loss_impl.1} parent=0 // pred_check
    _
  $region7: #{_focal_loss_impl.1} parent=0 // pred_check_branch
    %10 = sbr.rel (0) target = $region9
  $region8: #{_focal_loss_impl.1} parent=0 // pred_region
    _
  $region9: #{_focal_loss_impl.1} parent=0 // pred_fallthru
    _
  %p11 = scmp.eq.s32.totalorder 0, 0
  // Predicated region
  $region10: #{_focal_loss_impl.1} parent=0 // pred_check
    %p12 = pneg %p11
  $region11: #{_focal_loss_impl.1} parent=0 // pred_check_branch
    %14 = sbr.rel (%p12) target = $region13
  $region12: #{_focal_loss_impl.1} parent=0 // pred_region
    %15 = vst [vmem:[%s2] sm:$0xff] 0.0
  $region13: #{_focal_loss_impl.1} parent=0 // pred_fallthru
    _
  %v16 = vld [vmem:[%s0] sm:$0xff]
  %v17 = vld [vmem:[%s0 + $0x8] sm:$0xff]
  %v18 = vld [vmem:[%s1] sm:$0xff]
  %v19 = vld [vmem:[%s1 + $0x8] sm:$0xff]
  %v20 = vand.u32 2147483647, %v16
  %v21 = vand.u32 2147483647, %v17
  %v22 = vsub.f32 0.0, %v20
  %v23 = vsub.f32 0.0, %v21
  %v24 = vmul.f32 %v22, 1.442695
  %v25 = vpow.pop %v24
  %v26 = vmul.f32 %v23, 1.442695
  %v27 = vpow.pop %v26
  %v28 = vmax.f32 %v16, 0.0
  %v29 = vmax.f32 %v17, 0.0
  %v30 = vadd.f32 %v25, 1.0
  %v31 = vlog2.pop %v30
  %v32 = vmul.f32 %v31, 0.6931472
  %v33 = vmul.f32 -0.5, %v25
  %v34 = vadd.f32 %v33, 1.0
  %v35 = vmul.f32 %v34, %v25
  %v36 = vand.u32 2147483647, %v25
  %vm37 = vcmp.lt.f32.partialorder %v36, 0.0004427343
  %v38 = vsel %vm37, %v35, %v32
  %v39 = vadd.f32 %v27, 1.0
  %v40 = vlog2.pop %v39
  %v41 = vmul.f32 %v40, 0.6931472
  %v42 = vmul.f32 -0.5, %v27
  %v43 = vadd.f32 %v42, 1.0
  %v44 = vmul.f32 %v43, %v27
  %v45 = vand.u32 2147483647, %v27
  %vm46 = vcmp.lt.f32.partialorder %v45, 0.0004427343
  %v47 = vsel %vm46, %v44, %v41
  %v48 = vadd.f32 %v28, %v38
  %v49 = vadd.f32 %v29, %v47
  %v50 = vsub.f32 %v16, %v48
  %v51 = vsub.f32 %v17, %v49
  %v52 = vmax.f32 %v50, -100.0
  %v53 = vmax.f32 %v51, -100.0
  %v54 = vsub.f32 0.0, %v48
  %v55 = vsub.f32 0.0, %v49
  %v56 = vmax.f32 %v54, -100.0
  %v57 = vmax.f32 %v55, -100.0
  %v58 = vmul.f32 %v18, %v52
  %v59 = vmul.f32 %v19, %v53
  %v60 = vsub.f32 1.0, %v18
  %v61 = vsub.f32 1.0, %v19
  %v62 = vmul.f32 %v60, %v56
  %v63 = vmul.f32 %v61, %v57
  %v64 = vadd.f32 %v58, %v62
  %v65 = vadd.f32 %v59, %v63
  %v66 = vmul.f32 %v64, 1.442695
  %v67 = vpow.pop %v66
  %v68 = vmul.f32 %v65, 1.442695
  %v69 = vpow.pop %v68
  %v70 = vsub.f32 1.0, %v67
  %v71 = vsub.f32 1.0, %v69
  %v72 = vmul.f32 %v70, %v70
  %v73 = vmul.f32 %v71, %v71
  %v74 = vmul.f32 %v72, %v64
  %v75 = vmul.f32 %v73, %v65
  %v76 = vld [vmem:[%s2] sm:$0xff]
  %v77 = vadd.f32 %v74, %v75
  %v78 = vadd.f32 %v76, %v77
  %79 = vst [vmem:[%s2] sm:$0xff] %v78
  // Predicated region
  $region14: #{_focal_loss_impl.1} parent=0 // pred_check
    _
  $region15: #{_focal_loss_impl.1} parent=0 // pred_check_branch
    %81 = sbr.rel (0) target = $region17
  $region16: #{_focal_loss_impl.1} parent=0 // pred_region
    _
  $region17: #{_focal_loss_impl.1} parent=0 // pred_fallthru
    _
  // Predicated region
  $region18: #{_focal_loss_impl.1} parent=0 // pred_check
    _
  $region19: #{_focal_loss_impl.1} parent=0 // pred_check_branch
    %83 = sbr.rel (0) target = $region21
  $region20: #{_focal_loss_impl.1} parent=0 // pred_region
    _
  $region21: #{_focal_loss_impl.1} parent=0 // pred_fallthru
    _

</llo_original>
